<compile_context>
chip_gen: v5e
topology: v5e:2x2
jax: 0.10.0
libtpu: 0.0.40
codegen_flags: <defaults>
</compile_context>

<pallas_src>
import functools

import jax
import jax.numpy as jnp
from jax import lax
from jax.experimental import pallas as pl
from jax.experimental.pallas import tpu as pltpu

# --------------------------- scaled-down config ------------------------------
CLIP_IMAGE_SIZE = 16       # scaled from 336
CLIP_PATCH = 4             # scaled from 14
CLIP_HIDDEN = 32           # image_dim_out, scaled from 1024
CLIP_HEADS = 4
CLIP_FFN = 64
CLIP_LAYERS = 2
LAYER_IDX = -2             # -> use CLIP_LAYERS + LAYER_IDX + 1 encoder layers

CROP = CLIP_IMAGE_SIZE     # stands in for the 336-pixel HD crop unit

HIDDEN = 64                # phi-3 hidden_size, scaled from 3072
VOCAB = 128
LLM_LAYERS = 2
LLM_HEADS = 4
LLM_HEAD_DIM = HIDDEN // LLM_HEADS
LLM_FFN = 128
RMS_EPS = 1e-5
LN_EPS = 1e-5
ROPE_BASE = 10000.0
IMAGE_TOKEN_ID = 99        # stands in for _IMAGE_TOKEN_ID = 32044

BF16 = jnp.bfloat16
F32 = jnp.float32

VMEM_LIMIT = 32 * 1024 * 1024      # explicit scoped-VMEM limit on every call


# ------------------------------ small helpers --------------------------------
def _round_up(x, m):
    return ((x + m - 1) // m) * m


def _block_and_pad(dim, tile, align):
    """Pick a hardware-aligned block <= tile and the padded dim it tiles.

    dim <= tile        -> one full-extent block (exempt from (8,128) rule).
    dim  > tile        -> block is a multiple of `align`, dim padded to a
                          multiple of `align`, block shrunk until it divides
                          the padded dim exactly (worst case block == align).
    """
    if dim <= tile:
        return dim, dim
    padded = _round_up(dim, align)
    blk = max((tile // align) * align, align)
    while padded % blk != 0:
        blk -= align
    return blk, padded


def _replicated_spec(shape):
    """Full-array block that is re-used at every grid step."""
    nd = len(shape)
    return pl.BlockSpec(shape, lambda *args, _nd=nd: (0,) * _nd)


def _apply_act(name, x):
    if name is None:
        return x
    if name == "gelu":
        return jax.nn.gelu(x, approximate=False)            # nn.GELU()
    if name == "quick_gelu":
        return x * jax.nn.sigmoid(1.702 * x)                 # CLIP quick_gelu
    if name == "silu":
        return jax.nn.silu(x)
    raise ValueError(name)


def _softmax_rows(s):
    """Explicit row softmax: max-subtract, exp (EUP), sum, EUP reciprocal."""
    m = jnp.max(s, axis=-1, keepdims=True)
    p = jnp.exp(s - m)
    return p * pl.reciprocal(jnp.sum(p, axis=-1, keepdims=True), approx=True)


# -------------------------- tiled linear (matmul) -----------------------------
def _linear_nobias_kernel(x_ref, w_ref, o_ref, acc_ref, *, act):
    @pl.when(pl.program_id(2) == 0)
    def _():
        acc_ref[...] = jnp.zeros_like(acc_ref)
    # bf16 into the MXU (cast after the DMA), fp32 accumulation.
    acc_ref[...] += jnp.dot(x_ref[...].astype(BF16), w_ref[...].astype(BF16),
                            preferred_element_type=jnp.float32)

    @pl.when(pl.program_id(2) == pl.num_programs(2) - 1)
    def _():
        o_ref[...] = _apply_act(act, acc_ref[...]).astype(o_ref.dtype)


def _linear_bias_kernel(x_ref, w_ref, b_ref, o_ref, acc_ref, *, act):
    @pl.when(pl.program_id(2) == 0)
    def _():
        acc_ref[...] = jnp.zeros_like(acc_ref)
    acc_ref[...] += jnp.dot(x_ref[...].astype(BF16), w_ref[...].astype(BF16),
                            preferred_element_type=jnp.float32)

    @pl.when(pl.program_id(2) == pl.num_programs(2) - 1)
    def _():
        y = acc_ref[...] + b_ref[...]
        o_ref[...] = _apply_act(act, y).astype(o_ref.dtype)


def linear(x, w, b=None, act=None, out_dtype=BF16, tm=512, tn=512, tk=1024):
    """y = act(x @ w [+ b]).  Remainder-safe tiling, bf16 MXU, fp32 acc."""
    M, K = x.shape
    Kw, N = w.shape
    assert K == Kw
    bm, Mp = _block_and_pad(M, tm, 8)
    bn, Np = _block_and_pad(N, tn, 128)
    bk, Kp = _block_and_pad(K, tk, 128)

    xp = x if (Mp == M and Kp == K) else jnp.pad(x, ((0, Mp - M), (0, Kp - K)))
    wp = w if (Kp == K and Np == N) else jnp.pad(w, ((0, Kp - K), (0, Np - N)))

    grid = (Mp // bm, Np // bn, Kp // bk)
    x_spec = pl.BlockSpec((bm, bk), lambda i, j, k: (i, k))
    w_spec = pl.BlockSpec((bk, bn), lambda i, j, k: (k, j))
    o_spec = pl.BlockSpec((bm, bn), lambda i, j, k: (i, j))
    scratch = [pltpu.VMEM((bm, bn), jnp.float32)]
    cparams = pltpu.CompilerParams(
        dimension_semantics=("parallel", "parallel", "arbitrary"),
        vmem_limit_bytes=VMEM_LIMIT)

    if b is None:
        out = pl.pallas_call(
            functools.partial(_linear_nobias_kernel, act=act),
            out_shape=jax.ShapeDtypeStruct((Mp, Np), out_dtype),
            grid=grid,
            in_specs=[x_spec, w_spec],
            out_specs=o_spec,
            scratch_shapes=scratch,
            compiler_params=cparams,
        )(xp, wp)
    else:
        b2 = b.reshape(1, N).astype(F32)
        bp = b2 if Np == N else jnp.pad(b2, ((0, 0), (0, Np - N)))
        b_spec = pl.BlockSpec((1, bn), lambda i, j, k: (0, j))
        out = pl.pallas_call(
            functools.partial(_linear_bias_kernel, act=act),
            out_shape=jax.ShapeDtypeStruct((Mp, Np), out_dtype),
            grid=grid,
            in_specs=[x_spec, w_spec, b_spec],
            out_specs=o_spec,
            scratch_shapes=scratch,
            compiler_params=cparams,
        )(xp, wp, bp)

    if Mp != M or Np != N:
        out = out[:M, :N]
    return out


# ------------------------------ norm kernels ----------------------------------
def _layernorm_kernel(x_ref, w_ref, b_ref, o_ref, *, eps):
    x = x_ref[...].astype(F32)
    mu = jnp.mean(x, axis=-1, keepdims=True)
    var = jnp.mean(jnp.square(x - mu), axis=-1, keepdims=True)
    o_ref[...] = ((x - mu) * lax.rsqrt(var + eps) * w_ref[...]
                  + b_ref[...]).astype(o_ref.dtype)


def layernorm(x, w, b, eps=LN_EPS, block_rows=256, out_dtype=BF16):
    M, D = x.shape
    bm, Mp = _block_and_pad(M, block_rows, 8)
    xp = x if Mp == M else jnp.pad(x, ((0, Mp - M), (0, 0)))
    out = pl.pallas_call(
        functools.partial(_layernorm_kernel, eps=eps),
        out_shape=jax.ShapeDtypeStruct((Mp, D), out_dtype),
        grid=(Mp // bm,),
        in_specs=[pl.BlockSpec((bm, D), lambda i: (i, 0)),
                  pl.BlockSpec((1, D), lambda i: (0, 0)),
                  pl.BlockSpec((1, D), lambda i: (0, 0))],
        out_specs=pl.BlockSpec((bm, D), lambda i: (i, 0)),
        compiler_params=pltpu.CompilerParams(
            dimension_semantics=("parallel",), vmem_limit_bytes=VMEM_LIMIT),
    )(xp, w.reshape(1, D).astype(F32), b.reshape(1, D).astype(F32))
    return out if Mp == M else out[:M]


def _rmsnorm_kernel(x_ref, w_ref, o_ref, *, eps):
    x = x_ref[...].astype(F32)
    ms = jnp.mean(jnp.square(x), axis=-1, keepdims=True)
    o_ref[...] = (x * lax.rsqrt(ms + eps) * w_ref[...]).astype(o_ref.dtype)


def rmsnorm(x, w, eps=RMS_EPS, block_rows=256, out_dtype=BF16):
    M, D = x.shape
    bm, Mp = _block_and_pad(M, block_rows, 8)
    xp = x if Mp == M else jnp.pad(x, ((0, Mp - M), (0, 0)))
    out = pl.pallas_call(
        functools.partial(_rmsnorm_kernel, eps=eps),
        out_shape=jax.ShapeDtypeStruct((Mp, D), out_dtype),
        grid=(Mp // bm,),
        in_specs=[pl.BlockSpec((bm, D), lambda i: (i, 0)),
                  pl.BlockSpec((1, D), lambda i: (0, 0))],
        out_specs=pl.BlockSpec((bm, D), lambda i: (i, 0)),
        compiler_params=pltpu.CompilerParams(
            dimension_semantics=("parallel",), vmem_limit_bytes=VMEM_LIMIT),
    )(xp, w.reshape(1, D).astype(F32))
    return out if Mp == M else out[:M]


# ----------------------- fused CLIP encoder layer kernel ----------------------
def _clip_layer_kernel(h_ref, ln1w, ln1b, qkvw, qkvb, ow, ob,
                       ln2w, ln2b, fc1w, fc1b, fc2w, fc2b, out_ref,
                       *, heads, head_dim, eps, seq_valid):
    h = h_ref[0].astype(F32)                        # (Sp, D) f32 residual
    Sp = h.shape[0]
    D = heads * head_dim
    scale = head_dim ** -0.5

    # keys beyond the real sequence length (sublane padding) are masked out
    key_idx = lax.broadcasted_iota(jnp.int32, (Sp, Sp), 1)
    key_ok = key_idx < seq_valid

    # pre-attention LayerNorm (f32) + fused QKV matmul (bf16 -> f32 acc)
    mu = jnp.mean(h, axis=-1, keepdims=True)
    var = jnp.mean(jnp.square(h - mu), axis=-1, keepdims=True)
    x = ((h - mu) * lax.rsqrt(var + eps) * ln1w[...] + ln1b[...]).astype(BF16)
    qkv = jnp.dot(x, qkvw[...], preferred_element_type=jnp.float32) + qkvb[...]
    qkv_b = qkv.astype(BF16)                        # cast once, slice per head

    # per-head attention; heads concatenated once, single D-deep out-proj
    # TODO(synk): head-batch (grid axis / head-major layout) at production H.
    heads_out = []
    for hh in range(heads):
        lo = hh * head_dim
        q = qkv_b[:, lo:lo + head_dim]
        k = qkv_b[:, D + lo:D + lo + head_dim]
        v = qkv_b[:, 2 * D + lo:2 * D + lo + head_dim]
        s = lax.dot_general(q, k, (((1,), (1,)), ((), ())),
                            preferred_element_type=jnp.float32) * scale
        s = jnp.where(key_ok, s, jnp.float32(-1e30))
        p = _softmax_rows(s).astype(BF16)
        heads_out.append(jnp.dot(p, v, preferred_element_type=jnp.float32))
    attn = jnp.concatenate(heads_out, axis=-1).astype(BF16)   # (Sp, D)
    h = h + jnp.dot(attn, ow[...], preferred_element_type=jnp.float32) + ob[...]

    # pre-MLP LayerNorm + fc1(quick_gelu) + fc2 + residual
    mu = jnp.mean(h, axis=-1, keepdims=True)
    var = jnp.mean(jnp.square(h - mu), axis=-1, keepdims=True)
    x = ((h - mu) * lax.rsqrt(var + eps) * ln2w[...] + ln2b[...]).astype(BF16)
    g = jnp.dot(x, fc1w[...], preferred_element_type=jnp.float32) + fc1b[...]
    g = (g * jax.nn.sigmoid(1.702 * g)).astype(BF16)          # quick_gelu (f32)
    y = jnp.dot(g, fc2w[...], preferred_element_type=jnp.float32) + fc2b[...]
    out_ref[0] = (h + y).astype(out_ref.dtype)


def clip_encoder_layer(h_nsd, lp, seq_valid):
    """h_nsd: (N, Sp, D) bf16 residual stream -> same shape.  Grid = crops."""
    # TODO(synk): at production CLIP sizes the weights must be streamed
    # (emit_pipeline / extra grid axis) instead of held as replicated blocks.
    N, Sp, D = h_nsd.shape
    x_spec = pl.BlockSpec((1, Sp, D), lambda n: (n, 0, 0))
    weights = [lp["ln1_w"], lp["ln1_b"], lp["qkv_w"], lp["qkv_b"],
               lp["o_w"], lp["o_b"], lp["ln2_w"], lp["ln2_b"],
               lp["fc1_w"], lp["fc1_b"], lp["fc2_w"], lp["fc2_b"]]
    return pl.pallas_call(
        functools.partial(_clip_layer_kernel, heads=CLIP_HEADS,
                          head_dim=D // CLIP_HEADS, eps=LN_EPS,
                          seq_valid=seq_valid),
        out_shape=jax.ShapeDtypeStruct((N, Sp, D), BF16),
        grid=(N,),
        in_specs=[x_spec] + [_replicated_spec(w.shape) for w in weights],
        out_specs=x_spec,
        compiler_params=pltpu.CompilerParams(
            dimension_semantics=("parallel",), vmem_limit_bytes=VMEM_LIMIT),
    )(h_nsd, *weights)


# --------------------------- CLIP vision tower (glue) -------------------------
def clip_vision_model(pixel_values_nchw, vp):
    """pixel_values_nchw: (N, 3, H, W) — PyTorch NCHW.  Returns (N, 1+L, D)."""
    N, C, H, W = pixel_values_nchw.shape
    P = CLIP_PATCH
    gh, gw = H // P, W // P
    # Conv2d(kernel=P, stride=P, bias=False) == matmul over flattened patches.
    x = pixel_values_nchw.reshape(N, C, gh, P, gw, P)
    x = x.transpose(0, 2, 4, 1, 3, 5).reshape(N * gh * gw, C * P * P)
    patch_embeds = linear(x, vp["patch_w"])                    # Pallas matmul
    patch_embeds = patch_embeds.reshape(N, gh * gw, CLIP_HIDDEN)

    cls = jnp.broadcast_to(vp["class_embedding"].reshape(1, 1, CLIP_HIDDEN),
                           (N, 1, CLIP_HIDDEN)).astype(patch_embeds.dtype)
    h = jnp.concatenate([cls, patch_embeds], axis=1).astype(F32)
    h = h + vp["pos_embedding"][None, :, :]
    S = h.shape[1]

    # pad sequence to a sublane multiple up front; padded keys masked in-layer
    Sp = _round_up(S, 8)
    if Sp != S:
        h = jnp.pad(h, ((0, 0), (0, Sp - S), (0, 0)))

    h2d = layernorm(h.reshape(N * Sp, CLIP_HIDDEN),
                    vp["pre_ln_w"], vp["pre_ln_b"])            # bf16 stream
    h = h2d.reshape(N, Sp, CLIP_HIDDEN)
    for lp in vp["layers"]:
        h = clip_encoder_layer(h, lp, seq_valid=S)
    # post_layernorm intentionally skipped (vLLM layer_idx behaviour).
    return h[:, :S, :]


# ------------------------ Phi3 HD image embedding (glue) ----------------------
def reshape_hd_patches_2x2merge(feat, h_crop, w_crop):
    N, L, C = feat.shape
    num_images = N // (h_crop * w_crop)
    H = int(round(L ** 0.5))
    x = feat.reshape(N, H, H, C).reshape(N, H // 2, 2, H // 2, 2, C)
    x = x.transpose(0, 1, 3, 2, 4, 5).reshape(N, -1, 4 * C)
    x = x.reshape(num_images, h_crop, w_crop, H // 2, H // 2, 4 * C)
    x = x.transpose(0, 1, 3, 2, 4, 5).reshape(
        num_images, h_crop * H // 2, w_crop * H // 2, 4 * C)
    return x


def add_image_newline(x, sub_GN):
    n, h, w, d = x.shape
    nl = jnp.broadcast_to(sub_GN.reshape(1, 1, 1, d), (n, h, 1, d)).astype(x.dtype)
    return jnp.concatenate([x, nl], axis=2).reshape(n, -1, d)


def _img_proj_kernel(x_ref, w1, b1, w2, b2, o_ref):
    """Fused img_projection: Linear -> GELU -> Linear (bf16 MXU, f32 acc)."""
    x = x_ref[...].astype(BF16)
    y = jnp.dot(x, w1[...], preferred_element_type=jnp.float32) + b1[...]
    y = jax.nn.gelu(y, approximate=False)
    y = jnp.dot(y.astype(BF16), w2[...],
                preferred_element_type=jnp.float32) + b2[...]
    o_ref[...] = y.astype(o_ref.dtype)


def img_projection(x, vp, block_rows=256):
    M, K = x.shape
    N = vp["proj2_w"].shape[1]
    bm, Mp = _block_and_pad(M, block_rows, 8)
    xp = x if Mp == M else jnp.pad(x, ((0, Mp - M), (0, 0)))
    weights = [vp["proj1_w"], vp["proj1_b"], vp["proj2_w"], vp["proj2_b"]]
    out = pl.pallas_call(
        _img_proj_kernel,
        out_shape=jax.ShapeDtypeStruct((Mp, N), BF16),
        grid=(Mp // bm,),
        in_specs=[pl.BlockSpec((bm, K), lambda i: (i, 0))]
                 + [_replicated_spec(w.shape) for w in weights],
        out_specs=pl.BlockSpec((bm, N), lambda i: (i, 0)),
        compiler_params=pltpu.CompilerParams(
            dimension_semantics=("parallel",), vmem_limit_bytes=VMEM_LIMIT),
    )(xp, *weights)
    return out if Mp == M else out[:M]


def phi3_hd_image_embedding(pixel_values, image_sizes_static, params):
    """pixel_values: (num_images, 1+num_crops, 3, H, W); returns
    (num_images, num_img_tokens, HIDDEN)."""
    num_images, num_crops, c, h, w = pixel_values.shape
    flat = pixel_values.reshape(num_images * num_crops, c, h, w)
    feats = clip_vision_model(flat, params["clip"])        # (N, 1+L, C) bf16
    feats = feats[:, 1:, :]                                # type_feature='patch'
    feats = feats.reshape(num_images, num_crops, -1, CLIP_HIDDEN)

    glb = feats[:, 0]
    glb_hd = reshape_hd_patches_2x2merge(glb, 1, 1)
    glb_hd_nl = add_image_newline(glb_hd, params["sub_GN"])

    all_embeds = []
    for i, (ih, iw) in enumerate(image_sizes_static):      # hd_transform_order='sub_glb'
        h_crop = ih // CROP
        w_crop = iw // CROP
        nc = h_crop * w_crop
        sub = feats[i, 1:1 + nc]
        sub_hd = reshape_hd_patches_2x2merge(sub, h_crop, w_crop)
        sub_hd_nl = add_image_newline(sub_hd, params["sub_GN"])
        all_embeds.append(jnp.concatenate(
            [sub_hd_nl[0],
             params["glb_GN"].reshape(1, -1),
             glb_hd_nl[i]], axis=0))
    stacked = jnp.stack(all_embeds)                        # (ni, T_img, 4C)
    ni, ti, d4 = stacked.shape
    x = img_projection(stacked.reshape(ni * ti, d4), params)   # fused Pallas
    return x.reshape(ni, ti, HIDDEN)


def count_vision_tokens(image_sizes_static):
    half = (CLIP_IMAGE_SIZE // CLIP_PATCH) // 2
    total = 0
    for (ih, iw) in image_sizes_static:
        hc, wc = ih // CROP, iw // CROP
        total += (hc * half) * (wc * half + 1) + 1 + half * (half + 1)
    return total


# ------------------------ fused Llama decoder layer ----------------------------
def _apply_rope(x, cos, sin_rot, half):
    """x*cos + rotate_half(x)*sin with sin_rot = concat(-sin, sin).

    rotate_half(x)*sin == concat(x2, x1) * sin_rot, so the rotation is a pure
    half-swap (lane concat) — no MXU, no iota-built permutation matrix."""
    swapped = jnp.concatenate([x[:, half:], x[:, :half]], axis=-1)
    return x * cos + swapped * sin_rot


def _llama_layer_kernel(h_ref, cos_ref, sin_ref, in_ln, qkvw, ow,
                        post_ln, gate_up_w, down_w, out_ref,
                        *, heads, head_dim, eps):
    h = h_ref[...].astype(F32)                      # (T, D) f32 residual
    T = h.shape[0]
    D = heads * head_dim
    half = head_dim // 2
    scale = head_dim ** -0.5
    cos = cos_ref[...]                              # (T, head_dim) f32
    sin_rot = sin_ref[...]                          # sign-folded sin

    row = lax.broadcasted_iota(jnp.int32, (T, T), 0)
    col = lax.broadcasted_iota(jnp.int32, (T, T), 1)
    causal = col <= row

    # input RMSNorm + fused QKV (bf16 MXU, f32 acc)
    ms = jnp.mean(jnp.square(h), axis=-1, keepdims=True)
    x = (h * lax.rsqrt(ms + eps) * in_ln[...]).astype(BF16)
    qkv = jnp.dot(x, qkvw[...], preferred_element_type=jnp.float32)
    qkv_b = qkv.astype(BF16)                        # bf16 copy for v slices

    # TODO(synk): KV-block (flash-style online softmax) + head-batched layout
    # at production sequence lengths / head counts.
    heads_out = []
    for hh in range(heads):
        lo = hh * head_dim
        q = qkv[:, lo:lo + head_dim]
        k = qkv[:, D + lo:D + lo + head_dim]
        v = qkv_b[:, 2 * D + lo:2 * D + lo + head_dim]
        q = _apply_rope(q, cos, sin_rot, half).astype(BF16)
        k = _apply_rope(k, cos, sin_rot, half).astype(BF16)
        s = lax.dot_general(q, k, (((1,), (1,)), ((), ())),
                            preferred_element_type=jnp.float32) * scale
        s = jnp.where(causal, s, jnp.float32(-1e30))   # mask in f32 (safe)
        p = _softmax_rows(s).astype(BF16)
        heads_out.append(jnp.dot(p, v, preferred_element_type=jnp.float32))
    attn = jnp.concatenate(heads_out, axis=-1).astype(BF16)   # (T, D)
    h = h + jnp.dot(attn, ow[...], preferred_element_type=jnp.float32)

    # post RMSNorm + fused SwiGLU MLP + residual
    ms = jnp.mean(jnp.square(h), axis=-1, keepdims=True)
    x = (h * lax.rsqrt(ms + eps) * post_ln[...]).astype(BF16)
    gu = jnp.dot(x, gate_up_w[...], preferred_element_type=jnp.float32)
    I = gu.shape[-1] // 2
    hmlp = (jax.nn.silu(gu[:, :I]) * gu[:, I:]).astype(BF16)
    y = jnp.dot(hmlp, down_w[...], preferred_element_type=jnp.float32)
    out_ref[...] = (h + y).astype(out_ref.dtype)


def llama_layer(h, lp, cos, sin_rot):
    # TODO(synk): stream weights + parallel q-row/head grid axis at production
    # shapes (v7x has 64 MiB VMEM and 2 TensorCores).
    T, D = h.shape
    args = [h, cos, sin_rot, lp["in_ln"], lp["qkv_w"], lp["o_w"],
            lp["post_ln"], lp["gate_up_w"], lp["down_w"]]
    return pl.pallas_call(
        functools.partial(_llama_layer_kernel, heads=LLM_HEADS,
                          head_dim=LLM_HEAD_DIM, eps=RMS_EPS),
        out_shape=jax.ShapeDtypeStruct((T, D), BF16),
        grid=(1,),
        in_specs=[_replicated_spec(a.shape) for a in args],
        out_specs=_replicated_spec((T, D)),
        compiler_params=pltpu.CompilerParams(vmem_limit_bytes=VMEM_LIMIT),
    )(*args)


# ------------------------------ Llama model (glue) ----------------------------
def rope_cos_sin(positions, dim, base=ROPE_BASE):
    """Returns cos and a sign-folded sin: sin_rot = concat(-sin, sin)."""
    inv_freq = 1.0 / (base ** (jnp.arange(0, dim, 2, dtype=jnp.float32) / dim))
    freqs = positions.astype(jnp.float32)[:, None] * inv_freq[None, :]
    cos = jnp.concatenate([jnp.cos(freqs), jnp.cos(freqs)], axis=-1)
    sin = jnp.sin(freqs)
    sin_rot = jnp.concatenate([-sin, sin], axis=-1)
    return cos, sin_rot


def merge_vision_embeddings(input_ids, inputs_embeds, vision_embeddings,
                            image_token_id):
    flat_vis = vision_embeddings.reshape(-1, vision_embeddings.shape[-1])
    mask = input_ids == image_token_id
    idx = jnp.clip(jnp.cumsum(mask.astype(jnp.int32)) - 1, 0,
                   flat_vis.shape[0] - 1)
    gathered = flat_vis[idx]
    return jnp.where(mask[:, None], gathered, inputs_embeds)


def llama_model(input_ids, positions, inputs_embeds, params):
    if inputs_embeds is None:
        inputs_embeds = params["embed_tokens"][input_ids]
    cos, sin_rot = rope_cos_sin(positions, LLM_HEAD_DIM)
    h = inputs_embeds                                  # bf16 residual stream
    for lp in params["layers"]:
        h = llama_layer(h, lp, cos, sin_rot)
    return rmsnorm(h, params["final_ln"])


# ------------------------------- full model ----------------------------------
class Phi3VForCausalLM:
    def __init__(self, key):
        self.params = init_params(key)
        self.image_token_id = IMAGE_TOKEN_ID

    def forward(self, input_ids, positions, pixel_values=None,
                image_sizes=None):
        if pixel_values is not None:
            vision = phi3_hd_image_embedding(
                pixel_values, image_sizes, self.params["vision_embed_tokens"])
            embeds = self.params["model"]["embed_tokens"][input_ids]
            embeds = merge_vision_embeddings(
                input_ids, embeds, vision, self.image_token_id)
        else:
            embeds = None
        return llama_model(input_ids, positions, embeds, self.params["model"])

    def compute_logits(self, hidden_states):
        return linear(hidden_states, self.params["lm_head_w"], out_dtype=F32)


def init_params(key):
    keys = iter(jax.random.split(key, 128))

    def nrm(shape, scale=0.02, dtype=F32):
        return (scale * jax.random.normal(next(keys), shape,
                                          dtype=jnp.float32)).astype(dtype)

    zeros = lambda s: jnp.zeros(s, jnp.float32)
    ones = lambda s: jnp.ones(s, jnp.float32)

    num_patches = (CLIP_IMAGE_SIZE // CLIP_PATCH) ** 2
    num_pos = num_patches + 1
    n_clip_layers = CLIP_LAYERS + LAYER_IDX + 1       # num_hidden_layers_override

    clip_layers = []
    for _ in range(n_clip_layers):
        clip_layers.append(dict(
            ln1_w=ones((1, CLIP_HIDDEN)), ln1_b=zeros((1, CLIP_HIDDEN)),
            # q/k/v merged into a single slab (one weight DMA stream)
            qkv_w=nrm((CLIP_HIDDEN, 3 * CLIP_HIDDEN), dtype=BF16),
            qkv_b=zeros((1, 3 * CLIP_HIDDEN)),
            o_w=nrm((CLIP_HIDDEN, CLIP_HIDDEN), dtype=BF16),
            o_b=zeros((1, CLIP_HIDDEN)),
            ln2_w=ones((1, CLIP_HIDDEN)), ln2_b=zeros((1, CLIP_HIDDEN)),
            fc1_w=nrm((CLIP_HIDDEN, CLIP_FFN), dtype=BF16),
            fc1_b=zeros((1, CLIP_FFN)),
            fc2_w=nrm((CLIP_FFN, CLIP_HIDDEN), dtype=BF16),
            fc2_b=zeros((1, CLIP_HIDDEN)),
        ))
    clip = dict(
        patch_w=nrm((3 * CLIP_PATCH * CLIP_PATCH, CLIP_HIDDEN), dtype=BF16),
        class_embedding=nrm((CLIP_HIDDEN,)),
        pos_embedding=nrm((num_pos, CLIP_HIDDEN)),
        pre_ln_w=ones((CLIP_HIDDEN,)), pre_ln_b=zeros((CLIP_HIDDEN,)),
        layers=clip_layers,
    )

    d4 = 4 * CLIP_HIDDEN
    vision = dict(
        clip=clip,
        glb_GN=nrm((1, 1, d4), dtype=BF16),
        sub_GN=nrm((1, 1, 1, d4), dtype=BF16),
        proj1_w=nrm((d4, HIDDEN), dtype=BF16), proj1_b=zeros((1, HIDDEN)),
        proj2_w=nrm((HIDDEN, HIDDEN), dtype=BF16), proj2_b=zeros((1, HIDDEN)),
    )

    llm_layers = []
    for _ in range(LLM_LAYERS):
        llm_layers.append(dict(
            in_ln=ones((1, HIDDEN)),
            qkv_w=nrm((HIDDEN, 3 * HIDDEN), dtype=BF16),
            o_w=nrm((HIDDEN, HIDDEN), dtype=BF16),
            post_ln=ones((1, HIDDEN)),
            # gate + up merged into a single slab
            gate_up_w=nrm((HIDDEN, 2 * LLM_FFN), dtype=BF16),
            down_w=nrm((LLM_FFN, HIDDEN), dtype=BF16),
        ))
    model = dict(
        embed_tokens=nrm((VOCAB, HIDDEN), dtype=BF16),   # bf16 residual stream
        layers=llm_layers,
        final_ln=ones((HIDDEN,)),
    )
    return dict(vision_embed_tokens=vision, model=model,
                lm_head_w=nrm((HIDDEN, VOCAB), dtype=BF16))


# ---------------------------------- main --------------------------------------
if __name__ == "__main__":
    root = jax.random.PRNGKey(0)
    pkey, ikey = jax.random.split(root)

    model = Phi3VForCausalLM(pkey)

    # one image whose HD-transformed size is (h, w) = (2*CROP, 1*CROP)
    image_sizes = [(2 * CROP, 1 * CROP)]       # static (h, w) — like image_sizes
    num_images = 1
    num_crops_total = 1 + (image_sizes[0][0] // CROP) * (image_sizes[0][1] // CROP)
    pixel_values = jax.random.normal(
        ikey, (num_images, num_crops_total, 3, CLIP_IMAGE_SIZE, CLIP_IMAGE_SIZE),
        dtype=jnp.float32)

    n_vis = count_vision_tokens(image_sizes)   # = 19 for this config
    text_ids = jnp.array([1, 2, 3, 4, 5], jnp.int32)
    input_ids = jnp.concatenate(
        [jnp.full((n_vis,), IMAGE_TOKEN_ID, jnp.int32), text_ids])
    positions = jnp.arange(input_ids.shape[0], dtype=jnp.int32)

    hidden_states = model.forward(input_ids, positions,
                                  pixel_values=pixel_values,
                                  image_sizes=image_sizes)
    logits = model.compute_logits(hidden_states)
    jax.block_until_ready((hidden_states, logits))

    assert hidden_states.shape == (input_ids.shape[0], HIDDEN)
    assert logits.shape == (input_ids.shape[0], VOCAB)
    print("KERNEL_OK")
</pallas_src>

<mosaic_0001>
module attributes {stable_mosaic.version = 11 : i64} {
  func.func @_linear_nobias_kernel(%arg0: i32, %arg1: i32, %arg2: i32, %arg3: memref<48x48xf32, #tpu.memory_space<vmem>>, %arg4: memref<48x32xbf16, #tpu.memory_space<vmem>>, %arg5: memref<48x32xbf16, #tpu.memory_space<vmem>>, %arg6: memref<48x32xf32, #tpu.memory_space<vmem>>) attributes {dimension_semantics = [#tpu.dimension_semantics<parallel>, #tpu.dimension_semantics<parallel>, #tpu.dimension_semantics<arbitrary>], iteration_bounds = array<i64: 1, 1, 1>, scalar_prefetch = 0 : i64, scratch_operands = 1 : i64, tpu.core_type = #tpu.core_type<tc>, window_params = [{transform_indices = @transform_0, window_bounds = array<i64: 48, 48>}, {transform_indices = @transform_1, window_bounds = array<i64: 48, 32>}, {transform_indices = @transform_2, window_bounds = array<i64: 48, 32>}]} {
    %c0_i32 = arith.constant 0 : i32
    %0 = arith.cmpi eq, %arg2, %c0_i32 : i32
    %1 = arith.extui %0 : i1 to i32
    %c0_i32_0 = arith.constant 0 : i32
    %2 = arith.cmpi ne, %1, %c0_i32_0 : i32
    scf.if %2 {
      %cst_10 = arith.constant 0.000000e+00 : f32
      %13 = vector.broadcast %cst_10 : f32 to vector<48x32xf32>
      %c0_11 = arith.constant 0 : index
      %c0_12 = arith.constant 0 : index
      %14 = vector.load %arg6[%c0_11, %c0_12] : memref<48x32xf32, #tpu.memory_space<vmem>>, vector<48x32xf32>
      tpu.vector_store %arg6[%c0_11, %c0_12], %13 {strides = array<i32>} : memref<48x32xf32, #tpu.memory_space<vmem>>, vector<48x32xf32>,
    } else {
    }
    %c0 = arith.constant 0 : index
    %c0_1 = arith.constant 0 : index
    %3 = vector.load %arg6[%c0, %c0_1] : memref<48x32xf32, #tpu.memory_space<vmem>>, vector<48x32xf32>
    %c0_2 = arith.constant 0 : index
    %c0_3 = arith.constant 0 : index
    %4 = vector.load %arg3[%c0_2, %c0_3] : memref<48x48xf32, #tpu.memory_space<vmem>>, vector<48x48xf32>
    %5 = arith.truncf %4 : vector<48x48xf32> to vector<48x48xbf16>
    %c0_4 = arith.constant 0 : index
    %c0_5 = arith.constant 0 : index
    %6 = vector.load %arg4[%c0_4, %c0_5] : memref<48x32xbf16, #tpu.memory_space<vmem>>, vector<48x32xbf16>
    %cst = arith.constant dense<0.000000e+00> : vector<48x32xf32>
    %7 = tpu.matmul %5, %6, %cst {dimension_numbers = #tpu.dot_dimension_numbers<[1], [0], [0], [1], [0, 0, 1, 1], [], []>} : vector<48x48xbf16>, vector<48x32xbf16>, vector<48x32xf32> -> vector<48x32xf32>
    %8 = arith.addf %3, %7 : vector<48x32xf32>
    %c0_6 = arith.constant 0 : index
    %c0_7 = arith.constant 0 : index
    %9 = vector.load %arg6[%c0_6, %c0_7] : memref<48x32xf32, #tpu.memory_space<vmem>>, vector<48x32xf32>
    tpu.vector_store %arg6[%c0_6, %c0_7], %8 {strides = array<i32>} : memref<48x32xf32, #tpu.memory_space<vmem>>, vector<48x32xf32>,
    %c0_i32_8 = arith.constant 0 : i32
    %10 = arith.cmpi eq, %arg2, %c0_i32_8 : i32
    %11 = arith.extui %10 : i1 to i32
    %c0_i32_9 = arith.constant 0 : i32
    %12 = arith.cmpi ne, %11, %c0_i32_9 : i32
    scf.if %12 {
      %c0_10 = arith.constant 0 : index
      %c0_11 = arith.constant 0 : index
      %13 = vector.load %arg6[%c0_10, %c0_11] : memref<48x32xf32, #tpu.memory_space<vmem>>, vector<48x32xf32>
      %14 = arith.truncf %13 : vector<48x32xf32> to vector<48x32xbf16>
      %c0_12 = arith.constant 0 : index
      %c0_13 = arith.constant 0 : index
      %15 = vector.load %arg5[%c0_12, %c0_13] : memref<48x32xbf16, #tpu.memory_space<vmem>>, vector<48x32xbf16>
      tpu.vector_store %arg5[%c0_12, %c0_13], %14 {strides = array<i32>} : memref<48x32xbf16, #tpu.memory_space<vmem>>, vector<48x32xbf16>,
    } else {
    }
    return
  }
  func.func @transform_0(%arg0: i32, %arg1: i32, %arg2: i32) -> (i32, i32) {
    %c0_i32 = arith.constant 0 : i32
    return %arg0, %arg2 : i32, i32
  }
  func.func @transform_1(%arg0: i32, %arg1: i32, %arg2: i32) -> (i32, i32) {
    %c0_i32 = arith.constant 0 : i32
    return %arg2, %arg1 : i32, i32
  }
  func.func @transform_2(%arg0: i32, %arg1: i32, %arg2: i32) -> (i32, i32) {
    %c0_i32 = arith.constant 0 : i32
    return %arg0, %arg1 : i32, i32
  }
}

</mosaic_0001>

<llo_original>
// kernel: tpu_custom_call.1
$region0: #{tpu_custom_call.1}
  #allocation0 [shape = 'u32[]', space=smem, size = 0x4, offset = 0x4, fixed_abs, tag = 'smem constant byte address 0x4 - core index']
  #allocation1 [shape = 'u32[72,128]{1,0:T(1,128)}', space=vmem, size = 0x9000, scoped, tag = 'internal scratch']
  #allocation2 [shape = 'f32[48,32]{1,0:T(8,128)}', space=vmem, size = 0x6000, scoped, tag = 'scratch operand']
  %s0 = inlined_call_operand.hbm [shape: f32[48,48], index: 0, kind: input, shape index: {}]
  %s1 = inlined_call_operand.vmem [shape: bf16[48,32], index: 1, kind: input, shape index: {}]
  %s2 = inlined_call_operand.vmem [shape: bf16[48,32], index: 2, kind: output, shape index: {}]
  %s3 = sld [smem:[#allocation0]]
  $region30: #{tpu_custom_call.1} parent=0
    _
  %s5 = ssub.s32 1, %s3
  %s6 = scalar_select 0, %s5, %s3
  $region1: #{tpu_custom_call.1} parent=0
    #allocation3 [shape = 'u8[24576]{0}', space=vmem, size = 0x6000, scoped, tag = 'input window, operand 0, single buffered']
    #allocation4 [shape = 's32[1]{0}', space=sflag, size = 0x4, scoped, tag = 'scoped memory for tpu_custom_call.1']
    %7 = vsyncpa [#allocation4], 0
    // Predicated region
    $region2: #{tpu_custom_call.1} parent=1 // pred_check
      _
    $region3: #{tpu_custom_call.1} parent=1 // pred_check_branch
      %9 = sbr.rel (0) target = $region5
    $region4: #{tpu_custom_call.1} parent=1 // pred_region
      %11 = vsyncadd [#allocation4], 0
      %s12 = sshll.u32 %s0, 4
      %s13 = int_to_ptr.hbm [resolvable:$true] %s12
      %s14 = sshll.u32 [#allocation3], 4
      %s15 = int_to_ptr.vmem [resolvable:$true] %s14
      %20 = dma.hbm_to_vmem [thread:$0]  %s13, 768, %s15, [#allocation4], 128, 128, 8
    $region5: #{tpu_custom_call.1} parent=1 // pred_fallthru
      _
    // Predicated region
    $region6: #{tpu_custom_call.1} parent=1 // pred_check
      _
    $region7: #{tpu_custom_call.1} parent=1 // pred_check_branch
      %22 = sbr.rel (0) target = $region9
    $region8: #{tpu_custom_call.1} parent=1 // pred_region
      _
    $region9: #{tpu_custom_call.1} parent=1 // pred_fallthru
      _
    // Predicated region
    $region10: #{tpu_custom_call.1} parent=1 // pred_check
      _
    $region11: #{tpu_custom_call.1} parent=1 // pred_check_branch
      %24 = sbr.rel (0) target = $region13
    $region12: #{tpu_custom_call.1} parent=1 // pred_region
      %26 = dma.done [#allocation4], 768
    $region13: #{tpu_custom_call.1} parent=1 // pred_fallthru
      _
    %p28 = scmp.eq.s32.totalorder 0, 0
    // Predicated region
    $region14: #{tpu_custom_call.1} parent=1 // pred_check
      %p29 = pneg %p28
    $region15: #{tpu_custom_call.1} parent=1 // pred_check_branch
      %31 = sbr.rel (%p29) target = $region17
    $region16: #{tpu_custom_call.1} parent=1 // pred_region
      %vm32 = vcmask 261120
      %33 = vst.msk [vmem:[#allocation2] sm:$0xff] %vm32, 0.0
      %34 = vst.msk [vmem:[#allocation2 + $0x8] sm:$0xff] %vm32, 0.0
      %35 = vst.msk [vmem:[#allocation2 + $0x10] sm:$0xff] %vm32, 0.0
      %36 = vst.msk [vmem:[#allocation2 + $0x18] sm:$0xff] %vm32, 0.0
      %37 = vst.msk [vmem:[#allocation2 + $0x20] sm:$0xff] %vm32, 0.0
      %38 = vst.msk [vmem:[#allocation2 + $0x28] sm:$0xff] %vm32, 0.0
    $region17: #{tpu_custom_call.1} parent=1 // pred_fallthru
      _
    %v39 = vld [vmem:[#allocation2] sm:$0xff]
    %v40 = vld [vmem:[#allocation2 + $0x8] sm:$0xff]
    %v41 = vld [vmem:[#allocation2 + $0x10] sm:$0xff]
    %v42 = vld [vmem:[#allocation2 + $0x18] sm:$0xff]
    %v43 = vld [vmem:[#allocation2 + $0x20] sm:$0xff]
    %v44 = vld [vmem:[#allocation2 + $0x28] sm:$0xff]
    %v45 = vld [vmem:[#allocation3] sm:$0xff]
    %v46 = vld [vmem:[#allocation3 + $0x8] sm:$0xff]
    %v47 = vld [vmem:[#allocation3 + $0x10] sm:$0xff]
    %v48 = vld [vmem:[#allocation3 + $0x18] sm:$0xff]
    %v49 = vld [vmem:[#allocation3 + $0x20] sm:$0xff]
    %v50 = vld [vmem:[#allocation3 + $0x28] sm:$0xff]
    %v51 = vpack.c.bf16 %v46, %v45
    %v52 = vpack.c.bf16 %v48, %v47
    %v53 = vpack.c.bf16 %v50, %v49
    %v54 = vld [vmem:[%s1] sm:$0xf]
    %v55 = vld [vmem:[%s1 + $0x4] sm:$0xf]
    %v56 = vld [vmem:[%s1 + $0x8] sm:$0xf]
    %v57 = vld [vmem:[%s1 + $0xc] sm:$0xf]
    %v58 = vld [vmem:[%s1 + $0x10] sm:$0xf]
    %v59 = vld [vmem:[%s1 + $0x14] sm:$0xf]
    %v66 = vunpack.c.l.b16 %v54
    %v67 = vunpack.c.l.b16 %v55
    %v68 = vunpack.c.l.b16 %v56
    %v69 = vunpack.c.l.b16 %v57
    %v70 = vunpack.c.l.b16 %v58
    %v71 = vunpack.c.l.b16 %v59
    %v72 = vpack.c.b16 %v67, %v66
    %v73 = vpack.c.b16 %v69, %v68
    %v74 = vpack.c.b16 %v71, %v70
    %vm78 = vcmask 392192
    %v80 = vsel %vm78, %v51, 0
    %v83 = vsel %vm78, %v52, 0
    %v86 = vsel %vm78, %v53, 0
    %88 = vmatpush.bf16.msra.mxu0 0
    %89 = vmatpush.bf16.msra.mxu0 0
    %90 = vmatpush.bf16.msra.mxu0 0
    %91 = vmatpush.bf16.msra.mxu0 0
    %92 = vmatpush.bf16.msra.mxu0 0
    %93 = vmatpush.bf16.msra.mxu0 %v74
    %94 = vmatpush.bf16.msra.mxu0 %v73
    %95 = vmatpush.bf16.msra.mxu0 %v72
    %96 = vmatmul.bf16.gmra.mxu0 %v80
    %v97 = vpop.f32.mrf.mxu0
    %v98 = vadd.f32 0.0, %v97
    %v99 = vpop.f32.mrf.mxu0
    %v100 = vadd.f32 0.0, %v99
    %101 = vmatmul.bf16.gmra.mxu0 %v83
    %v102 = vpop.f32.mrf.mxu0
    %v103 = vadd.f32 0.0, %v102
    %v104 = vpop.f32.mrf.mxu0
    %v105 = vadd.f32 0.0, %v104
    %106 = vmatmul.bf16.gmra.mxu0 %v86
    %v107 = vpop.f32.mrf.mxu0
    %v108 = vadd.f32 0.0, %v107
    %v109 = vpop.f32.mrf.mxu0
    %v110 = vadd.f32 0.0, %v109
    %111 = vdwg.mxu0
    %v112 = vadd.f32 %v39, %v98
    %v113 = vadd.f32 %v40, %v100
    %v114 = vadd.f32 %v41, %v103
    %v115 = vadd.f32 %v42, %v105
    %v116 = vadd.f32 %v43, %v108
    %v117 = vadd.f32 %v44, %v110
    %vm118 = vcmask 261120
    %119 = vst.msk [vmem:[#allocation2] sm:$0xff] %vm118, %v112
    %120 = vst.msk [vmem:[#allocation2 + $0x8] sm:$0xff] %vm118, %v113
    %121 = vst.msk [vmem:[#allocation2 + $0x10] sm:$0xff] %vm118, %v114
    %122 = vst.msk [vmem:[#allocation2 + $0x18] sm:$0xff] %vm118, %v115
    %123 = vst.msk [vmem:[#allocation2 + $0x20] sm:$0xff] %vm118, %v116
    %124 = vst.msk [vmem:[#allocation2 + $0x28] sm:$0xff] %vm118, %v117
    // Predicated region
    $region18: #{tpu_custom_call.1} parent=1 // pred_check
      %p125 = pneg %p28
    $region19: #{tpu_custom_call.1} parent=1 // pred_check_branch
      %127 = sbr.rel (%p125) target = $region21
    $region20: #{tpu_custom_call.1} parent=1 // pred_region
      %v128 = vld [vmem:[#allocation2] sm:$0xff]
      %v129 = vld [vmem:[#allocation2 + $0x8] sm:$0xff]
      %v130 = vld [vmem:[#allocation2 + $0x10] sm:$0xff]
      %v131 = vld [vmem:[#allocation2 + $0x18] sm:$0xff]
      %v132 = vld [vmem:[#allocation2 + $0x20] sm:$0xff]
      %v133 = vld [vmem:[#allocation2 + $0x28] sm:$0xff]
      %v134 = vpack.c.bf16 %v128, %v128
      %v135 = vpack.c.bf16 %v129, %v129
      %v136 = vpack.c.bf16 %v130, %v130
      %v137 = vpack.c.bf16 %v131, %v131
      %v138 = vpack.c.bf16 %v132, %v132
      %v139 = vpack.c.bf16 %v133, %v133
      %vm140 = vcmask 257024
      %141 = vst.msk [vmem:[%s2] sm:$0xf] %vm140, %v134
      %142 = vst.msk [vmem:[%s2 + $0x4] sm:$0xf] %vm140, %v135
      %143 = vst.msk [vmem:[%s2 + $0x8] sm:$0xf] %vm140, %v136
      %144 = vst.msk [vmem:[%s2 + $0xc] sm:$0xf] %vm140, %v137
      %145 = vst.msk [vmem:[%s2 + $0x10] sm:$0xf] %vm140, %v138
      %146 = vst.msk [vmem:[%s2 + $0x14] sm:$0xf] %vm140, %v139
    $region21: #{tpu_custom_call.1} parent=1 // pred_fallthru
      _
    // Predicated region
    $region22: #{tpu_custom_call.1} parent=1 // pred_check
      _
    $region23: #{tpu_custom_call.1} parent=1 // pred_check_branch
      %148 = sbr.rel (0) target = $region25
    $region24: #{tpu_custom_call.1} parent=1 // pred_region
      _
    $region25: #{tpu_custom_call.1} parent=1 // pred_fallthru
      _
    // Predicated region
    $region26: #{tpu_custom_call.1} parent=1 // pred_check
      _
    $region27: #{tpu_custom_call.1} parent=1 // pred_check_branch
      %150 = sbr.rel (0) target = $region29
    $region28: #{tpu_custom_call.1} parent=1 // pred_region
      _
    $region29: #{tpu_custom_call.1} parent=1 // pred_fallthru
      _
    %151 = vsyncpa [#allocation4], 1

</llo_original>
